<compile_context>
chip_gen: v7x
topology: tpu7x:2x2x1
jax: 0.10.0
libtpu: 0.0.40
codegen_flags: <defaults>
</compile_context>

<pallas_src>
import functools

import jax
import jax.numpy as jnp
from jax.experimental import pallas as pl
from jax.experimental.pallas import tpu as pltpu

LANES = 128
MAX_BLOCK_ROWS = 4096  # 4096 x 128 x 4B = 2 MiB per f32 input block


def _charbonnier_kernel(pred_ref, gt_ref, out_ref, acc_ref, *,
                        eps, block_rows, blocks_per_shard, total_rows):
    c = pl.program_id(0)          # shard (parallel across TCs on v7x)
    i = pl.program_id(1)          # block within shard (reduction axis)

    @pl.when(i == 0)
    def _init():
        acc_ref[...] = jnp.zeros_like(acc_ref)

    p = pred_ref[...].astype(jnp.float32)
    g = gt_ref[...].astype(jnp.float32)
    d = p - g
    val = jnp.sqrt(d * d + jnp.float32(eps))

    # Valid rows of this *logical* block. == block_rows for every steady-state
    # block, < block_rows only for the final partial block, <= 0 for the
    # duplicated (clamped) block when num_blocks is odd under 2-way sharding.
    block_row0 = (c * blocks_per_shard + i) * block_rows
    valid = total_rows - block_row0

    @pl.when(valid >= block_rows)
    def _full_block():
        acc_ref[...] += val

    @pl.when(valid < block_rows)
    def _partial_block():
        rid = jax.lax.broadcasted_iota(jnp.int32, val.shape, 0)
        acc_ref[...] += jnp.where(rid < valid, val, jnp.float32(0.0))

    @pl.when(i == pl.num_programs(1) - 1)
    def _finalize():
        # Single sublane reduce per shard; lane-dense (1,128) partial output.
        out_ref[0] = jnp.sum(acc_ref[...], axis=0, keepdims=True)


def charbonnier_loss(pred, gt, eps=0.01):
    assert pred.shape == gt.shape
    eps = float(eps)
    total_n = int(pred.size)

    pred_flat = pred.reshape(-1)
    gt_flat = gt.reshape(-1)

    # Rare path: element count not a multiple of 128 lanes -> pad with zeros
    # (each padded zero contributes sqrt(eps); corrected after the kernel).
    lane_pad = (-total_n) % LANES
    if lane_pad:
        # TODO(synk): this rare path pays one extra copy of the inputs; a
        # copy-free variant would stream the <128-element tail in plain JAX.
        pred_flat = jnp.pad(pred_flat, (0, lane_pad))
        gt_flat = jnp.pad(gt_flat, (0, lane_pad))

    rows = (total_n + lane_pad) // LANES
    pred2d = pred_flat.reshape(rows, LANES)
    gt2d = gt_flat.reshape(rows, LANES)

    block_rows = min(MAX_BLOCK_ROWS, rows)      # full-dim block if rows small
    num_blocks = pl.cdiv(rows, block_rows)
    num_shards = 2 if num_blocks >= 2 else 1    # use both TCs on v7x
    blocks_per_shard = pl.cdiv(num_blocks, num_shards)

    def idx_map(c, i):
        # Clamp so an odd block count never produces an out-of-range block
        # index; the clamped duplicate is fully masked inside the kernel.
        return (jnp.minimum(c * blocks_per_shard + i, num_blocks - 1), 0)

    kernel = functools.partial(
        _charbonnier_kernel,
        eps=eps,
        block_rows=block_rows,
        blocks_per_shard=blocks_per_shard,
        total_rows=rows,
    )

    bytes_in = pred2d.size * pred2d.dtype.itemsize + gt2d.size * gt2d.dtype.itemsize
    cost = pl.CostEstimate(
        flops=5 * total_n,
        transcendentals=total_n,
        bytes_accessed=bytes_in + num_shards * LANES * 4,
    )

    partials = pl.pallas_call(
        kernel,
        out_shape=jax.ShapeDtypeStruct((num_shards, 1, LANES), jnp.float32),
        grid_spec=pltpu.PrefetchScalarGridSpec(
            num_scalar_prefetch=0,
            grid=(num_shards, blocks_per_shard),
            in_specs=[
                pl.BlockSpec((block_rows, LANES), idx_map),
                pl.BlockSpec((block_rows, LANES), idx_map),
            ],
            out_specs=pl.BlockSpec((1, 1, LANES), lambda c, i: (c, 0, 0)),
            scratch_shapes=[pltpu.VMEM((block_rows, LANES), jnp.float32)],
        ),
        compiler_params=pltpu.CompilerParams(
            dimension_semantics=("parallel", "arbitrary"),
            vmem_limit_bytes=32 * 1024 * 1024,
        ),
        cost_estimate=cost,
    )(pred2d, gt2d)

    total = jnp.sum(partials, dtype=jnp.float32)
    if lane_pad:
        total = total - jnp.float32(lane_pad) * jnp.sqrt(jnp.float32(eps))
    return total / jnp.float32(total_n)


def _check(shape, key, eps=0.01, rtol=1e-4, atol=1e-6):
    k1, k2 = jax.random.split(key)
    pred = jax.random.normal(k1, shape, dtype=jnp.float32)
    gt = jax.random.normal(k2, shape, dtype=jnp.float32)
    loss = jax.block_until_ready(charbonnier_loss(pred, gt, eps=eps))
    ref = jnp.mean(jnp.sqrt((pred - gt) ** 2 + eps))
    assert jnp.allclose(loss, ref, rtol=rtol, atol=atol), (shape, loss, ref)
    return loss


if __name__ == "__main__":
    key = jax.random.PRNGKey(0)

    # Primary small test, NCHW like the PyTorch module's inputs.
    k0, k1, k2 = jax.random.split(key, 3)
    _check((2, 4, 16, 16), k0)

    # Extra self-checks: lane-padding path (numel % 128 != 0) and the
    # multi-block / 2-shard / partial-last-block path.
    _check((3, 3, 37, 53), k1)        # single block + lane padding
    _check((1, 4, 520, 520), k2)      # 3 blocks, 2 shards, partial + dup block

    print("KERNEL_OK")
</pallas_src>

<mosaic_0001>
module attributes {stable_mosaic.version = 11 : i64} {
  func.func @_charbonnier_kernel(%arg0: i32, %arg1: i32, %arg2: memref<16x128xf32, #tpu.memory_space<vmem>>, %arg3: memref<16x128xf32, #tpu.memory_space<vmem>>, %arg4: memref<1x1x128xf32, #tpu.memory_space<vmem>>, %arg5: memref<16x128xf32, #tpu.memory_space<vmem>>) attributes {dimension_semantics = [#tpu.dimension_semantics<parallel>, #tpu.dimension_semantics<arbitrary>], iteration_bounds = array<i64: 1, 1>, scalar_prefetch = 0 : i64, scratch_operands = 1 : i64, tpu.core_type = #tpu.core_type<tc>, window_params = [{transform_indices = @transform_0, window_bounds = array<i64: 16, 128>}, {transform_indices = @transform_1, window_bounds = array<i64: 16, 128>}, {transform_indices = @transform_2, window_bounds = array<i64: 1, 1, 128>}]} {
    %c0_i32 = arith.constant 0 : i32
    %0 = arith.cmpi eq, %arg1, %c0_i32 : i32
    %1 = arith.extui %0 : i1 to i32
    %c0_i32_0 = arith.constant 0 : i32
    %2 = arith.cmpi ne, %1, %c0_i32_0 : i32
    scf.if %2 {
      %cst_11 = arith.constant 0.000000e+00 : f32
      %23 = vector.broadcast %cst_11 : f32 to vector<16x128xf32>
      %c0_12 = arith.constant 0 : index
      %c0_13 = arith.constant 0 : index
      %24 = vector.load %arg5[%c0_12, %c0_13] : memref<16x128xf32, #tpu.memory_space<vmem>>, vector<16x128xf32>
      tpu.vector_store %arg5[%c0_12, %c0_13], %23 {strides = array<i32>} : memref<16x128xf32, #tpu.memory_space<vmem>>, vector<16x128xf32>,
    } else {
    }
    %c0 = arith.constant 0 : index
    %c0_1 = arith.constant 0 : index
    %3 = vector.load %arg2[%c0, %c0_1] : memref<16x128xf32, #tpu.memory_space<vmem>>, vector<16x128xf32>
    %c0_2 = arith.constant 0 : index
    %c0_3 = arith.constant 0 : index
    %4 = vector.load %arg3[%c0_2, %c0_3] : memref<16x128xf32, #tpu.memory_space<vmem>>, vector<16x128xf32>
    %5 = arith.subf %3, %4 : vector<16x128xf32>
    %6 = arith.mulf %5, %5 : vector<16x128xf32>
    %cst = arith.constant 0.00999999977 : f32
    %7 = vector.broadcast %cst : f32 to vector<16x128xf32>
    %8 = arith.addf %6, %7 : vector<16x128xf32>
    %9 = math.sqrt %8 : vector<16x128xf32>
    %c1_i32 = arith.constant 1 : i32
    %10 = arith.muli %arg0, %c1_i32 : i32
    %11 = arith.addi %10, %arg1 : i32
    %c16_i32 = arith.constant 16 : i32
    %12 = arith.muli %11, %c16_i32 : i32
    %c16_i32_4 = arith.constant 16 : i32
    %13 = arith.subi %c16_i32_4, %12 : i32
    %c16_i32_5 = arith.constant 16 : i32
    %14 = arith.cmpi sge, %13, %c16_i32_5 : i32
    %15 = arith.extui %14 : i1 to i32
    %c0_i32_6 = arith.constant 0 : i32
    %16 = arith.cmpi ne, %15, %c0_i32_6 : i32
    scf.if %16 {
      %c0_11 = arith.constant 0 : index
      %c0_12 = arith.constant 0 : index
      %23 = vector.load %arg5[%c0_11, %c0_12] : memref<16x128xf32, #tpu.memory_space<vmem>>, vector<16x128xf32>
      %24 = arith.addf %23, %9 : vector<16x128xf32>
      %c0_13 = arith.constant 0 : index
      %c0_14 = arith.constant 0 : index
      %25 = vector.load %arg5[%c0_13, %c0_14] : memref<16x128xf32, #tpu.memory_space<vmem>>, vector<16x128xf32>
      tpu.vector_store %arg5[%c0_13, %c0_14], %24 {strides = array<i32>} : memref<16x128xf32, #tpu.memory_space<vmem>>, vector<16x128xf32>,
    } else {
    }
    %c16_i32_7 = arith.constant 16 : i32
    %17 = arith.cmpi slt, %13, %c16_i32_7 : i32
    %18 = arith.extui %17 : i1 to i32
    %c0_i32_8 = arith.constant 0 : i32
    %19 = arith.cmpi ne, %18, %c0_i32_8 : i32
    scf.if %19 {
      %23 = tpu.iota {dimensions = array<i32: 0>} : vector<16x128xi32>
      %c0_11 = arith.constant 0 : index
      %c0_12 = arith.constant 0 : index
      %24 = vector.load %arg5[%c0_11, %c0_12] : memref<16x128xf32, #tpu.memory_space<vmem>>, vector<16x128xf32>
      %25 = vector.broadcast %13 : i32 to vector<16x128xi32>
      %26 = arith.cmpi slt, %23, %25 : vector<16x128xi32>
      %cst_13 = arith.constant 0.000000e+00 : f32
      %27 = vector.broadcast %cst_13 : f32 to vector<16x128xf32>
      %28 = arith.select %26, %9, %27 : vector<16x128xi1>, vector<16x128xf32>
      %29 = arith.addf %24, %28 : vector<16x128xf32>
      %c0_14 = arith.constant 0 : index
      %c0_15 = arith.constant 0 : index
      %30 = vector.load %arg5[%c0_14, %c0_15] : memref<16x128xf32, #tpu.memory_space<vmem>>, vector<16x128xf32>
      tpu.vector_store %arg5[%c0_14, %c0_15], %29 {strides = array<i32>} : memref<16x128xf32, #tpu.memory_space<vmem>>, vector<16x128xf32>,
    } else {
    }
    %c0_i32_9 = arith.constant 0 : i32
    %20 = arith.cmpi eq, %arg1, %c0_i32_9 : i32
    %21 = arith.extui %20 : i1 to i32
    %c0_i32_10 = arith.constant 0 : i32
    %22 = arith.cmpi ne, %21, %c0_i32_10 : i32
    scf.if %22 {
      %c0_11 = arith.constant 0 : index
      %c0_12 = arith.constant 0 : index
      %23 = vector.load %arg5[%c0_11, %c0_12] : memref<16x128xf32, #tpu.memory_space<vmem>>, vector<16x128xf32>
      %cst_13 = arith.constant dense<0.000000e+00> : vector<128xf32>
      %24 = vector.multi_reduction <add>, %23, %cst_13 [0] : vector<16x128xf32> to vector<128xf32>
      %25 = vector.shape_cast %24 : vector<128xf32> to vector<1x128xf32>
      %c0_14 = arith.constant 0 : index
      %c0_15 = arith.constant 0 : index
      %c0_16 = arith.constant 0 : index
      %26 = vector.load %arg4[%c0_14, %c0_15, %c0_16] : memref<1x1x128xf32, #tpu.memory_space<vmem>>, vector<1x1x128xf32>
      %27 = vector.shape_cast %26 : vector<1x1x128xf32> to vector<1x128xf32>
      %28 = vector.shape_cast %25 : vector<1x128xf32> to vector<1x1x128xf32>
      tpu.vector_store %arg4[%c0_14, %c0_15, %c0_16], %28 {strides = array<i32>} : memref<1x1x128xf32, #tpu.memory_space<vmem>>, vector<1x1x128xf32>,
    } else {
    }
    return
  }
  func.func @transform_0(%arg0: i32, %arg1: i32) -> (i32, i32) {
    %c1_i32 = arith.constant 1 : i32
    %0 = arith.muli %arg0, %c1_i32 : i32
    %1 = arith.addi %0, %arg1 : i32
    %c0_i32 = arith.constant 0 : i32
    %2 = arith.minsi %1, %c0_i32 : i32
    %c0_i32_0 = arith.constant 0 : i32
    %c0_i32_1 = arith.constant 0 : i32
    return %2, %c0_i32_0 : i32, i32
  }
  func.func @transform_1(%arg0: i32, %arg1: i32) -> (i32, i32) {
    %c1_i32 = arith.constant 1 : i32
    %0 = arith.muli %arg0, %c1_i32 : i32
    %1 = arith.addi %0, %arg1 : i32
    %c0_i32 = arith.constant 0 : i32
    %2 = arith.minsi %1, %c0_i32 : i32
    %c0_i32_0 = arith.constant 0 : i32
    %c0_i32_1 = arith.constant 0 : i32
    return %2, %c0_i32_0 : i32, i32
  }
  func.func @transform_2(%arg0: i32, %arg1: i32) -> (i32, i32, i32) {
    %c0_i32 = arith.constant 0 : i32
    %c0_i32_0 = arith.constant 0 : i32
    %c0_i32_1 = arith.constant 0 : i32
    return %arg0, %c0_i32, %c0_i32_0 : i32, i32, i32
  }
}

</mosaic_0001>

<llo_original>
// kernel: tpu_custom_call.1
$region0: #{tpu_custom_call.1}
  #allocation0 [shape = 'u32[]', space=smem, size = 0x4, offset = 0x4, fixed_abs, tag = 'smem constant byte address 0x4 - core index']
  #allocation1 [shape = 'u32[144,128]{1,0:T(1,128)}', space=vmem, size = 0x12000, scoped, tag = 'internal scratch']
  #allocation2 [shape = 'f32[16,128]{1,0:T(8,128)}', space=vmem, size = 0x2000, scoped, tag = 'scratch operand']
  %s0 = inlined_call_operand.hbm [shape: f32[16,128], index: 0, kind: input, shape index: {}]
  %s1 = inlined_call_operand.hbm [shape: f32[16,128], index: 1, kind: input, shape index: {}]
  %s2 = inlined_call_operand.hbm [shape: f32[1,1,128], index: 2, kind: output, shape index: {}]
  %s3 = sld [smem:[#allocation0]]
  $region42: #{tpu_custom_call.1} parent=0
    _
  %s5 = ssub.s32 1, %s3
  %s6 = scalar_select 0, %s5, %s3
  $region1: #{tpu_custom_call.1} parent=0
    #allocation3 [shape = 'u8[8192]{0}', space=vmem, size = 0x2000, scoped, tag = 'input window, operand 0, single buffered']
    #allocation4 [shape = 's32[1]{0}', space=sflag, size = 0x4, scoped, tag = 'scoped memory for tpu_custom_call.1']
    #allocation5 [shape = 's32[1]{0}', space=sflag, size = 0x4, scoped, tag = 'scoped memory for tpu_custom_call.1']
    #allocation6 [shape = 'u8[8192]{0}', space=vmem, size = 0x2000, scoped, tag = 'input window, operand 1, single buffered']
    #allocation7 [shape = 's32[1]{0}', space=sflag, size = 0x4, scoped, tag = 'scoped memory for tpu_custom_call.1']
    #allocation8 [shape = 'u8[512]{0}', space=vmem, size = 0x400, scoped, tag = 'output window, operand 0, single buffered']
    %7 = vsyncpa [#allocation4], 0
    %8 = vsyncpa [#allocation7], 0
    %9 = vsyncpa [#allocation5], 0
    // Predicated region
    $region2: #{tpu_custom_call.1} parent=1 // pred_check
      _
    $region3: #{tpu_custom_call.1} parent=1 // pred_check_branch
      %11 = sbr.rel (0) target = $region5
    $region4: #{tpu_custom_call.1} parent=1 // pred_region
      %s12 = sadd.s32 0, 0
      %p13 = scmp.lt.s32.totalorder %s12, 0
      %s14 = scalar_select %p13, %s12, 0
      %s15 = smul.u32 2, %s14
      %s17 = ssub.s32 256, 256
      %18 = vsyncadd [#allocation4], %s17
      %s19 = smul.addr %s15, 128
      %s20 = scalar_lea.hbm %s0, %s19
      %s21 = sshll.u32 [#allocation3], 4
      %s22 = int_to_ptr.vmem [resolvable:$true] %s21
      %27 = dma.hbm_to_vmem [thread:$0]  %s20, 256, %s22, [#allocation4], 128, 128, 8
    $region5: #{tpu_custom_call.1} parent=1 // pred_fallthru
      _
    // Predicated region
    $region6: #{tpu_custom_call.1} parent=1 // pred_check
      _
    $region7: #{tpu_custom_call.1} parent=1 // pred_check_branch
      %29 = sbr.rel (0) target = $region9
    $region8: #{tpu_custom_call.1} parent=1 // pred_region
      %s30 = sadd.s32 0, 0
      %p31 = scmp.lt.s32.totalorder %s30, 0
      %s32 = scalar_select %p31, %s30, 0
      %s33 = smul.u32 2, %s32
      %s35 = ssub.s32 256, 256
      %36 = vsyncadd [#allocation7], %s35
      %s37 = smul.addr %s33, 128
      %s38 = scalar_lea.hbm %s1, %s37
      %s39 = sshll.u32 [#allocation6], 4
      %s40 = int_to_ptr.vmem [resolvable:$true] %s39
      %45 = dma.hbm_to_vmem [thread:$0]  %s38, 256, %s40, [#allocation7], 128, 128, 8
    $region9: #{tpu_custom_call.1} parent=1 // pred_fallthru
      _
    // Predicated region
    $region10: #{tpu_custom_call.1} parent=1 // pred_check
      _
    $region11: #{tpu_custom_call.1} parent=1 // pred_check_branch
      %47 = sbr.rel (0) target = $region13
    $region12: #{tpu_custom_call.1} parent=1 // pred_region
      %48 = dma.done [#allocation4], 256
    $region13: #{tpu_custom_call.1} parent=1 // pred_fallthru
      _
    // Predicated region
    $region14: #{tpu_custom_call.1} parent=1 // pred_check
      _
    $region15: #{tpu_custom_call.1} parent=1 // pred_check_branch
      %50 = sbr.rel (0) target = $region17
    $region16: #{tpu_custom_call.1} parent=1 // pred_region
      %51 = dma.done [#allocation7], 256
    $region17: #{tpu_custom_call.1} parent=1 // pred_fallthru
      _
    %s52 = sadd.s32 0, 0
    %p53 = scmp.lt.s32.totalorder %s52, 0
    %s54 = scalar_select %p53, %s52, 0
    %s55 = smul.u32 2, %s54
    %s56 = sadd.s32 0, 0
    %p57 = scmp.lt.s32.totalorder %s56, 0
    %s58 = scalar_select %p57, %s56, 0
    %s59 = smul.u32 2, %s58
    %p60 = scmp.eq.s32.totalorder 0, 0
    // Predicated region
    $region18: #{tpu_custom_call.1} parent=1 // pred_check
      %p61 = pneg %p60
    $region19: #{tpu_custom_call.1} parent=1 // pred_check_branch
      %63 = sbr.rel (%p61) target = $region21
    $region20: #{tpu_custom_call.1} parent=1 // pred_region
      %64 = vst [vmem:[#allocation2] sm:$0xff] 0.0
      %65 = vst [vmem:[#allocation2 + $0x8] sm:$0xff] 0.0
    $region21: #{tpu_custom_call.1} parent=1 // pred_fallthru
      _
    %v66 = vld [vmem:[#allocation3] sm:$0xff]
    %v67 = vld [vmem:[#allocation3 + $0x8] sm:$0xff]
    %v68 = vld [vmem:[#allocation6] sm:$0xff]
    %v69 = vld [vmem:[#allocation6 + $0x8] sm:$0xff]
    %v70 = vsub.f32 %v66, %v68
    %v71 = vsub.f32 %v67, %v69
    %v72 = vmul.f32 %v70, %v70
    %v73 = vmul.f32 %v71, %v71
    %v74 = vadd.f32 %v72, 0.01
    %v75 = vadd.f32 %v73, 0.01
    %v76 = vrsqrt.pop %v74
    %v77 = vmul.f32 %v74, %v76
    %vm78 = vcmp.eq.f32.partialorder %v74, inf
    %v79 = vsel %vm78, %v74, %v77
    %vm80 = vcmp.eq.f32.partialorder %v74, 0.0
    %v81 = vand.u32 %v74, 2147483648
    %v82 = vsel %vm80, %v81, %v79
    %v83 = vrsqrt.pop %v75
    %v84 = vmul.f32 %v75, %v83
    %vm85 = vcmp.eq.f32.partialorder %v75, inf
    %v86 = vsel %vm85, %v75, %v84
    %vm87 = vcmp.eq.f32.partialorder %v75, 0.0
    %v88 = vand.u32 %v75, 2147483648
    %v89 = vsel %vm87, %v88, %v86
    %s90 = sadd.s32 0, 0
    %s91 = smul.u32 %s90, 16
    %s92 = ssub.s32 16, %s91
    %p93 = scmp.ge.s32.totalorder %s92, 16
    // Predicated region
    $region22: #{tpu_custom_call.1} parent=1 // pred_check
      %p94 = pneg %p93
    $region23: #{tpu_custom_call.1} parent=1 // pred_check_branch
      %96 = sbr.rel (%p94) target = $region25
    $region24: #{tpu_custom_call.1} parent=1 // pred_region
      %v97 = vld [vmem:[#allocation2] sm:$0xff]
      %v98 = vld [vmem:[#allocation2 + $0x8] sm:$0xff]
      %v99 = vadd.f32 %v97, %v82
      %v100 = vadd.f32 %v98, %v89
      %101 = vst [vmem:[#allocation2] sm:$0xff] %v99
      %102 = vst [vmem:[#allocation2 + $0x8] sm:$0xff] %v100
    $region25: #{tpu_custom_call.1} parent=1 // pred_fallthru
      _
    %p103 = scmp.lt.s32.totalorder %s92, 16
    // Predicated region
    $region26: #{tpu_custom_call.1} parent=1 // pred_check
      %p104 = pneg %p103
    $region27: #{tpu_custom_call.1} parent=1 // pred_check_branch
      %106 = sbr.rel (%p104) target = $region29
    $region28: #{tpu_custom_call.1} parent=1 // pred_region
      %v107 = vlaneseq
      %v108 = vshrl.u32 %v107, 7
      %v109 = vadd.s32 %v108, 8
      %v110 = vld [vmem:[#allocation2] sm:$0xff]
      %v111 = vld [vmem:[#allocation2 + $0x8] sm:$0xff]
      %v112 = vstv %s92
      %vm113 = vcmp.lt.s32.totalorder %v108, %v112
      %vm114 = vcmp.lt.s32.totalorder %v109, %v112
      %v115 = vsel %vm113, %v82, 0.0
      %v116 = vsel %vm114, %v89, 0.0
      %v117 = vadd.f32 %v110, %v115
      %v118 = vadd.f32 %v111, %v116
      %119 = vst [vmem:[#allocation2] sm:$0xff] %v117
      %120 = vst [vmem:[#allocation2 + $0x8] sm:$0xff] %v118
    $region29: #{tpu_custom_call.1} parent=1 // pred_fallthru
      _
    // Predicated region
    $region30: #{tpu_custom_call.1} parent=1 // pred_check
      %p121 = pneg %p60
    $region31: #{tpu_custom_call.1} parent=1 // pred_check_branch
      %123 = sbr.rel (%p121) target = $region33
    $region32: #{tpu_custom_call.1} parent=1 // pred_region
      %v124 = vld [vmem:[#allocation2] sm:$0xff]
      %v125 = vld [vmem:[#allocation2 + $0x8] sm:$0xff]
      %v126 = vadd.f32 %v124, %v125
      %v127 = vrot.slane %v126, 4
      %v128 = vadd.f32 %v126, %v127
      %v129 = vrot.slane %v128, 2
      %v130 = vadd.f32 %v128, %v129
      %v131 = vrot.slane %v130, 1
      %v132 = vadd.f32 %v130, %v131
      %133 = vst [vmem:[#allocation8] sm:$0x1] %v132
    $region33: #{tpu_custom_call.1} parent=1 // pred_fallthru
      _
    // Predicated region
    $region34: #{tpu_custom_call.1} parent=1 // pred_check
      _
    $region35: #{tpu_custom_call.1} parent=1 // pred_check_branch
      %135 = sbr.rel (0) target = $region37
    $region36: #{tpu_custom_call.1} parent=1 // pred_region
      %s137 = ssub.s32 16, 16
      %138 = vsyncadd [#allocation5], %s137
      %s140 = sshll.u32 [#allocation8], 4
      %s141 = int_to_ptr.vmem [resolvable:$true] %s140
      %143 = dma.vmem_to_hbm [thread:$0]  %s141, 16, %s2, [#allocation5]
    $region37: #{tpu_custom_call.1} parent=1 // pred_fallthru
      _
    // Predicated region
    $region38: #{tpu_custom_call.1} parent=1 // pred_check
      _
    $region39: #{tpu_custom_call.1} parent=1 // pred_check_branch
      %145 = sbr.rel (0) target = $region41
    $region40: #{tpu_custom_call.1} parent=1 // pred_region
      %146 = dma.done [#allocation5], 16
    $region41: #{tpu_custom_call.1} parent=1 // pred_fallthru
      _
    %147 = vsyncpa [#allocation4], 1
    %148 = vsyncpa [#allocation7], 1
    %149 = vsyncpa [#allocation5], 1

</llo_original>
